<compile_context>
chip_gen: v7x
topology: tpu7x:2x2x1
jax: 0.10.0
libtpu: 0.0.40
codegen_flags: <defaults>
</compile_context>

<pallas_src>
import math

import jax
import jax.numpy as jnp
from jax.experimental import pallas as pl
from jax.experimental.pallas import tpu as pltpu

HIDDEN = 100
_LANE = 128
_SUBLANE = 8


def _round_up(n: int, m: int) -> int:
    return ((n + m - 1) // m) * m


def _mlp_kernel(x_ref, w1_ref, b1_ref, w2_ref, b2_ref, w3_ref, b3_ref, out_ref):
    # x tile arrives in its input dtype (f32 from HBM); cast once to bf16 for
    # the MXU. Accumulation is f32; bias/ReLU in f32; re-cast to bf16 between
    # layers so every matmul runs native bf16 on the MXU.
    x = x_ref[...].astype(jnp.bfloat16)

    h1 = jnp.dot(x, w1_ref[...], preferred_element_type=jnp.float32) + b1_ref[...]
    h1 = jnp.maximum(h1, 0.0).astype(jnp.bfloat16)

    h2 = jnp.dot(h1, w2_ref[...], preferred_element_type=jnp.float32) + b2_ref[...]
    h2 = jnp.maximum(h2, 0.0).astype(jnp.bfloat16)

    y = jnp.dot(h2, w3_ref[...], preferred_element_type=jnp.float32) + b3_ref[...]
    out_ref[...] = y.astype(out_ref.dtype)


def prepare_params(params, *, compute_dtype=jnp.bfloat16):
    """One-time prep: pad feature dims to lane multiples, cast weights to bf16.

    params = (w1, b1, w2, b2, w3, b3), weights stored (in, out) (transposed vs.
    PyTorch nn.Linear), biases 1-D. Zero padding of the hidden/output feature
    dims is numerically exact for matmul + bias + ReLU. The contraction (K)
    dim of W1 is deliberately NOT padded (x is fed unpadded).
    """
    w1, b1, w2, b2, w3, b3 = params
    input_size, hidden = w1.shape
    output_size = w3.shape[1]

    hid_p = _round_up(hidden, _LANE)        # 100 -> 128
    out_p = _round_up(output_size, _LANE)   # e.g. 10 -> 128

    w1p = jnp.pad(w1, ((0, 0), (0, hid_p - hidden))).astype(compute_dtype)
    b1p = jnp.pad(b1.reshape(1, -1), ((0, 0), (0, hid_p - hidden))).astype(jnp.float32)
    w2p = jnp.pad(w2, ((0, hid_p - hidden), (0, hid_p - hidden))).astype(compute_dtype)
    b2p = jnp.pad(b2.reshape(1, -1), ((0, 0), (0, hid_p - hidden))).astype(jnp.float32)
    w3p = jnp.pad(w3, ((0, hid_p - hidden), (0, out_p - output_size))).astype(compute_dtype)
    b3p = jnp.pad(b3.reshape(1, -1), ((0, 0), (0, out_p - output_size))).astype(jnp.float32)

    meta = (int(input_size), int(hidden), int(output_size))
    return (w1p, b1p, w2p, b2p, w3p, b3p), meta


def mnist_mlp_old_forward(x, prepared, *, tile_b: int = 2048):
    """x: (batch, *) -> logits (batch, output_size). Flattens trailing dims."""
    (w1p, b1p, w2p, b2p, w3p, b3p), (input_size, _hidden, output_size) = prepared
    hid_p = w1p.shape[1]
    out_p = w3p.shape[1]

    # x.view(-1, num_flat_features(x)) equivalent.
    x2d = x.reshape(-1, input_size)
    batch = x2d.shape[0]
    out_dtype = x2d.dtype
    x_itemsize = jnp.dtype(x2d.dtype).itemsize
    o_itemsize = jnp.dtype(out_dtype).itemsize

    # Batch tile: multiple of 8 sublanes, capped by request and batch size.
    tb = min(_round_up(tile_b, _SUBLANE), _round_up(batch, _SUBLANE))
    # v7x: keep at least 2 grid steps whenever possible so the "parallel"
    # batch axis shards across both TensorCores (harmless on v5e/v6e).
    if batch > _SUBLANE:
        tb = min(tb, _round_up(-(-batch // 2), _SUBLANE))
    # Clamp tb so double-buffered activation tiles stay under ~20 MiB of VMEM.
    act_row_bytes = 2 * (x_itemsize * input_size + o_itemsize * out_p)
    max_rows = max(_SUBLANE, ((20 << 20) // act_row_bytes) // _SUBLANE * _SUBLANE)
    tb = min(tb, max_rows)

    grid = (pl.cdiv(batch, tb),)

    # VMEM budget: double-buffered activation tiles + weights (counted twice,
    # conservative) + f32/bf16 intermediates headroom. Never below the need;
    # capped at 48 MiB which is safe on v5e/v6e (128 MiB) and v7x (64 MiB).
    weight_bytes = sum(
        int(a.size) * jnp.dtype(a.dtype).itemsize
        for a in (w1p, b1p, w2p, b2p, w3p, b3p)
    )
    needed = (
        2 * tb * input_size * x_itemsize      # x tile, double-buffered
        + 2 * tb * out_p * o_itemsize         # out tile, double-buffered
        + 2 * weight_bytes                    # resident weights/biases
        + 6 * tb * hid_p * 4                  # h1/h2/y intermediates headroom
    )
    vmem_limit = int(min(max(needed + (4 << 20), 32 << 20), 48 << 20))

    out_padded = pl.pallas_call(
        _mlp_kernel,
        out_shape=jax.ShapeDtypeStruct((batch, out_p), out_dtype),
        grid=grid,
        in_specs=[
            # x: tiled on batch; last dim == full array dim (no K padding),
            # ragged final batch block handled by Pallas (rows independent).
            pl.BlockSpec((tb, input_size), lambda i: (i, 0)),
            pl.BlockSpec((input_size, hid_p), lambda i: (0, 0)),  # W1 resident
            pl.BlockSpec((1, hid_p), lambda i: (0, 0)),           # b1 resident
            pl.BlockSpec((hid_p, hid_p), lambda i: (0, 0)),       # W2 resident
            pl.BlockSpec((1, hid_p), lambda i: (0, 0)),           # b2 resident
            pl.BlockSpec((hid_p, out_p), lambda i: (0, 0)),       # W3 resident
            pl.BlockSpec((1, out_p), lambda i: (0, 0)),           # b3 resident
        ],
        out_specs=pl.BlockSpec((tb, out_p), lambda i: (i, 0)),
        compiler_params=pltpu.CompilerParams(
            dimension_semantics=("parallel",),
            vmem_limit_bytes=vmem_limit,
        ),
    )(x2d, w1p, b1p, w2p, b2p, w3p, b3p)

    # Only the lane (feature) padding needs slicing; batch dim is exact.
    return out_padded[:, :output_size]


def init_params(key, input_size, output_size, dtype=jnp.float32):
    """Deterministic Xavier(uniform) init, biases zero. Weights stored (in, out)."""
    k1, k2, k3 = jax.random.split(key, 3)

    def xavier(k, fan_in, fan_out):
        limit = math.sqrt(6.0 / (fan_in + fan_out))
        return jax.random.uniform(
            k, (fan_in, fan_out), dtype=dtype, minval=-limit, maxval=limit
        )

    w1 = xavier(k1, input_size, HIDDEN)
    b1 = jnp.zeros((HIDDEN,), dtype=dtype)
    w2 = xavier(k2, HIDDEN, HIDDEN)
    b2 = jnp.zeros((HIDDEN,), dtype=dtype)
    w3 = xavier(k3, HIDDEN, output_size)
    b3 = jnp.zeros((output_size,), dtype=dtype)
    return (w1, b1, w2, b2, w3, b3)


def _reference_forward(x, params):
    w1, b1, w2, b2, w3, b3 = params
    x2d = x.reshape(-1, w1.shape[0])
    h1 = jnp.maximum(x2d @ w1 + b1, 0.0)
    h2 = jnp.maximum(h1 @ w2 + b2, 0.0)
    return h2 @ w3 + b3


if __name__ == "__main__":
    key = jax.random.PRNGKey(0)
    kx1, kx2, kp = jax.random.split(key, 3)

    # Small MNIST-like shapes. input_size=200 (not a multiple of 128) and
    # batch=13 deliberately exercise the unpadded-K path and a ragged final
    # batch block; tile_b=8 forces a multi-step grid with resident weights.
    input_size, output_size = 200, 10
    params = init_params(kp, input_size, output_size)
    prepared = prepare_params(params)  # one-time pad + bf16 cast

    # bf16 matmul operands with f32 accumulation -> relaxed tolerance vs f32 ref.
    ATOL = RTOL = 2e-2

    # Case 1: multi-tile grid with ragged final batch block.
    x1 = jax.random.normal(kx1, (13, input_size), dtype=jnp.float32)
    out1 = jax.block_until_ready(mnist_mlp_old_forward(x1, prepared, tile_b=8))
    ref1 = _reference_forward(x1, params)
    assert out1.shape == (13, output_size)
    assert jnp.allclose(out1, ref1, atol=ATOL, rtol=RTOL)

    # Case 2: default tiling (2-step grid for the v7x parallel split).
    x2 = jax.random.normal(kx2, (16, input_size), dtype=jnp.float32)
    out2 = jax.block_until_ready(mnist_mlp_old_forward(x2, prepared))
    ref2 = _reference_forward(x2, params)
    assert out2.shape == (16, output_size)
    assert jnp.allclose(out2, ref2, atol=ATOL, rtol=RTOL)

    print("KERNEL_OK")
</pallas_src>

<mosaic_0001>
module attributes {stable_mosaic.version = 11 : i64} {
  func.func @_mlp_kernel(%arg0: i32, %arg1: memref<8x200xf32, #tpu.memory_space<vmem>>, %arg2: memref<200x128xbf16, #tpu.memory_space<vmem>>, %arg3: memref<1x128xf32, #tpu.memory_space<vmem>>, %arg4: memref<128x128xbf16, #tpu.memory_space<vmem>>, %arg5: memref<1x128xf32, #tpu.memory_space<vmem>>, %arg6: memref<128x128xbf16, #tpu.memory_space<vmem>>, %arg7: memref<1x128xf32, #tpu.memory_space<vmem>>, %arg8: memref<8x128xf32, #tpu.memory_space<vmem>>) attributes {dimension_semantics = [#tpu.dimension_semantics<parallel>], iteration_bounds = array<i64: 2>, scalar_prefetch = 0 : i64, scratch_operands = 0 : i64, tpu.core_type = #tpu.core_type<tc>, window_params = [{transform_indices = @transform_0, window_bounds = array<i64: 8, 200>}, {pipeline_mode = #tpu.pipeline_mode<synchronous>, transform_indices = @transform_1, window_bounds = array<i64: 200, 128>}, {pipeline_mode = #tpu.pipeline_mode<synchronous>, transform_indices = @transform_2, window_bounds = array<i64: 1, 128>}, {pipeline_mode = #tpu.pipeline_mode<synchronous>, transform_indices = @transform_3, window_bounds = array<i64: 128, 128>}, {pipeline_mode = #tpu.pipeline_mode<synchronous>, transform_indices = @transform_4, window_bounds = array<i64: 1, 128>}, {pipeline_mode = #tpu.pipeline_mode<synchronous>, transform_indices = @transform_5, window_bounds = array<i64: 128, 128>}, {pipeline_mode = #tpu.pipeline_mode<synchronous>, transform_indices = @transform_6, window_bounds = array<i64: 1, 128>}, {transform_indices = @transform_7, window_bounds = array<i64: 8, 128>}]} {
    %c0 = arith.constant 0 : index
    %c0_0 = arith.constant 0 : index
    %0 = vector.load %arg1[%c0, %c0_0] : memref<8x200xf32, #tpu.memory_space<vmem>>, vector<8x200xf32>
    %1 = arith.truncf %0 : vector<8x200xf32> to vector<8x200xbf16>
    %c0_1 = arith.constant 0 : index
    %c0_2 = arith.constant 0 : index
    %2 = vector.load %arg2[%c0_1, %c0_2] : memref<200x128xbf16, #tpu.memory_space<vmem>>, vector<200x128xbf16>
    %cst = arith.constant dense<0.000000e+00> : vector<8x128xf32>
    %3 = tpu.matmul %1, %2, %cst {dimension_numbers = #tpu.dot_dimension_numbers<[1], [0], [0], [1], [0, 0, 1, 1], [], []>} : vector<8x200xbf16>, vector<200x128xbf16>, vector<8x128xf32> -> vector<8x128xf32>
    %c0_3 = arith.constant 0 : index
    %c0_4 = arith.constant 0 : index
    %4 = vector.load %arg3[%c0_3, %c0_4] : memref<1x128xf32, #tpu.memory_space<vmem>>, vector<1x128xf32>
    %5 = vector.broadcast %4 : vector<1x128xf32> to vector<8x128xf32>
    %6 = arith.addf %3, %5 : vector<8x128xf32>
    %cst_5 = arith.constant 0.000000e+00 : f32
    %7 = vector.broadcast %cst_5 : f32 to vector<8x128xf32>
    %8 = arith.maximumf %6, %7 : vector<8x128xf32>
    %9 = arith.truncf %8 : vector<8x128xf32> to vector<8x128xbf16>
    %c0_6 = arith.constant 0 : index
    %c0_7 = arith.constant 0 : index
    %10 = vector.load %arg4[%c0_6, %c0_7] : memref<128x128xbf16, #tpu.memory_space<vmem>>, vector<128x128xbf16>
    %cst_8 = arith.constant dense<0.000000e+00> : vector<8x128xf32>
    %11 = tpu.matmul %9, %10, %cst_8 {dimension_numbers = #tpu.dot_dimension_numbers<[1], [0], [0], [1], [0, 0, 1, 1], [], []>} : vector<8x128xbf16>, vector<128x128xbf16>, vector<8x128xf32> -> vector<8x128xf32>
    %c0_9 = arith.constant 0 : index
    %c0_10 = arith.constant 0 : index
    %12 = vector.load %arg5[%c0_9, %c0_10] : memref<1x128xf32, #tpu.memory_space<vmem>>, vector<1x128xf32>
    %13 = vector.broadcast %12 : vector<1x128xf32> to vector<8x128xf32>
    %14 = arith.addf %11, %13 : vector<8x128xf32>
    %cst_11 = arith.constant 0.000000e+00 : f32
    %15 = vector.broadcast %cst_11 : f32 to vector<8x128xf32>
    %16 = arith.maximumf %14, %15 : vector<8x128xf32>
    %17 = arith.truncf %16 : vector<8x128xf32> to vector<8x128xbf16>
    %c0_12 = arith.constant 0 : index
    %c0_13 = arith.constant 0 : index
    %18 = vector.load %arg6[%c0_12, %c0_13] : memref<128x128xbf16, #tpu.memory_space<vmem>>, vector<128x128xbf16>
    %cst_14 = arith.constant dense<0.000000e+00> : vector<8x128xf32>
    %19 = tpu.matmul %17, %18, %cst_14 {dimension_numbers = #tpu.dot_dimension_numbers<[1], [0], [0], [1], [0, 0, 1, 1], [], []>} : vector<8x128xbf16>, vector<128x128xbf16>, vector<8x128xf32> -> vector<8x128xf32>
    %c0_15 = arith.constant 0 : index
    %c0_16 = arith.constant 0 : index
    %20 = vector.load %arg7[%c0_15, %c0_16] : memref<1x128xf32, #tpu.memory_space<vmem>>, vector<1x128xf32>
    %21 = vector.broadcast %20 : vector<1x128xf32> to vector<8x128xf32>
    %22 = arith.addf %19, %21 : vector<8x128xf32>
    %c0_17 = arith.constant 0 : index
    %c0_18 = arith.constant 0 : index
    %23 = vector.load %arg8[%c0_17, %c0_18] : memref<8x128xf32, #tpu.memory_space<vmem>>, vector<8x128xf32>
    tpu.vector_store %arg8[%c0_17, %c0_18], %22 {strides = array<i32>} : memref<8x128xf32, #tpu.memory_space<vmem>>, vector<8x128xf32>,
    return
  }
  func.func @transform_0(%arg0: i32) -> (i32, i32) {
    %c0_i32 = arith.constant 0 : i32
    %c0_i32_0 = arith.constant 0 : i32
    return %arg0, %c0_i32 : i32, i32
  }
  func.func @transform_1(%arg0: i32) -> (i32, i32) {
    %c0_i32 = arith.constant 0 : i32
    %c0_i32_0 = arith.constant 0 : i32
    %c0_i32_1 = arith.constant 0 : i32
    return %c0_i32, %c0_i32_0 : i32, i32
  }
  func.func @transform_2(%arg0: i32) -> (i32, i32) {
    %c0_i32 = arith.constant 0 : i32
    %c0_i32_0 = arith.constant 0 : i32
    %c0_i32_1 = arith.constant 0 : i32
    return %c0_i32, %c0_i32_0 : i32, i32
  }
  func.func @transform_3(%arg0: i32) -> (i32, i32) {
    %c0_i32 = arith.constant 0 : i32
    %c0_i32_0 = arith.constant 0 : i32
    %c0_i32_1 = arith.constant 0 : i32
    return %c0_i32, %c0_i32_0 : i32, i32
  }
  func.func @transform_4(%arg0: i32) -> (i32, i32) {
    %c0_i32 = arith.constant 0 : i32
    %c0_i32_0 = arith.constant 0 : i32
    %c0_i32_1 = arith.constant 0 : i32
    return %c0_i32, %c0_i32_0 : i32, i32
  }
  func.func @transform_5(%arg0: i32) -> (i32, i32) {
    %c0_i32 = arith.constant 0 : i32
    %c0_i32_0 = arith.constant 0 : i32
    %c0_i32_1 = arith.constant 0 : i32
    return %c0_i32, %c0_i32_0 : i32, i32
  }
  func.func @transform_6(%arg0: i32) -> (i32, i32) {
    %c0_i32 = arith.constant 0 : i32
    %c0_i32_0 = arith.constant 0 : i32
    %c0_i32_1 = arith.constant 0 : i32
    return %c0_i32, %c0_i32_0 : i32, i32
  }
  func.func @transform_7(%arg0: i32) -> (i32, i32) {
    %c0_i32 = arith.constant 0 : i32
    %c0_i32_0 = arith.constant 0 : i32
    return %arg0, %c0_i32 : i32, i32
  }
}

</mosaic_0001>

<llo_original>
// kernel: tpu_custom_call.1
$region0: #{tpu_custom_call.1}
  #allocation0 [shape = 'u32[]', space=smem, size = 0x4, offset = 0x4, fixed_abs, tag = 'smem constant byte address 0x4 - core index']
  #allocation1 [shape = 'u32[144,128]{1,0:T(1,128)}', space=vmem, size = 0x12000, scoped, tag = 'internal scratch']
  %s0 = inlined_call_operand.hbm [shape: f32[13,200], index: 0, kind: input, shape index: {}]
  %s1 = inlined_call_operand.hbm [shape: bf16[200,128], index: 1, kind: input, shape index: {}]
  %s2 = inlined_call_operand.vmem [shape: f32[1,128], index: 2, kind: input, shape index: {}]
  %s3 = inlined_call_operand.hbm [shape: bf16[128,128], index: 3, kind: input, shape index: {}]
  %s4 = inlined_call_operand.vmem [shape: f32[1,128], index: 4, kind: input, shape index: {}]
  %s5 = inlined_call_operand.hbm [shape: bf16[128,128], index: 5, kind: input, shape index: {}]
  %s6 = inlined_call_operand.vmem [shape: f32[1,128], index: 6, kind: input, shape index: {}]
  %s7 = inlined_call_operand.hbm [shape: f32[13,128], index: 7, kind: output, shape index: {}]
  %s8 = sld [smem:[#allocation0]]
  $region77: #{tpu_custom_call.1} parent=0
    _
  %s10 = ssub.s32 1, %s8
  %s11 = scalar_select 0, %s10, %s8
  $region1: #{tpu_custom_call.1} parent=0
    #allocation2 [shape = 'u8[16384]{0}', space=vmem, size = 0x4000, scoped, tag = 'input window, operand 0']
    #allocation3 [shape = 's32[2]{0}', space=sflag, size = 0x8, scoped, tag = 'scoped memory for tpu_custom_call.1']
    #allocation4 [shape = 's32[2]{0}', space=sflag, size = 0x8, scoped, tag = 'scoped memory for tpu_custom_call.1']
    #allocation5 [shape = 'u8[51200]{0}', space=vmem, size = 0xc800, scoped, tag = 'input window, operand 1, single buffered']
    #allocation6 [shape = 's32[1]{0}', space=sflag, size = 0x4, scoped, tag = 'scoped memory for tpu_custom_call.1']
    #allocation7 [shape = 'u8[32768]{0}', space=vmem, size = 0x8000, scoped, tag = 'input window, operand 3, single buffered']
    #allocation8 [shape = 'u8[32768]{0}', space=vmem, size = 0x8000, scoped, tag = 'input window, operand 5, single buffered']
    #allocation9 [shape = 's32[1]{0}', space=sflag, size = 0x4, scoped, tag = 'scoped memory for tpu_custom_call.1']
    #allocation10 [shape = 'u8[8192]{0}', space=vmem, size = 0x2000, scoped, tag = 'output window, operand 0']
    %12 = vsyncpa [#allocation3], 0
    %s13 = scalar_lea.sflag [#allocation3], 1
    %14 = vsyncpa %s13, 0
    %15 = vsyncpa [#allocation6], 0
    %16 = vsyncpa [#allocation9], 0
    %17 = vsyncpa [#allocation4], 0
    %s18 = scalar_lea.sflag [#allocation4], 1
    %19 = vsyncpa %s18, 0
    loop: start=0, step=1, limit=4
    $region2: #{tpu_custom_call.1} parent=1 // loop_pre_header
      _
    $region3: #{tpu_custom_call.1} parent=1 // loop_header
      %s21 = sphi 0, %s25
      %p22 = scmp.ge.s32.totalorder %s21, 4
      %s31 = sphi 0, %s33
      %s34 = sphi 0, %s31
      %s35 = sphi 0, %s34
      %s51 = sphi 0, %s35
      %s55 = sphi 0, %s55
      %s57 = sphi 0, %s55
      %s58 = sphi 0, %s57
      %s72 = sphi 0, %s58
      %s76 = sphi 0, %s76
      %s78 = sphi 0, %s76
      %s79 = sphi 0, %s78
      %s93 = sphi 0, %s79
      %s97 = sphi 0, %s97
      %s99 = sphi 0, %s97
      %s100 = sphi 0, %s99
      %s114 = sphi 0, %s100
      %s118 = sphi 0, %s118
      %s120 = sphi 0, %s118
      %s121 = sphi 0, %s120
      %s135 = sphi 0, %s121
      %s139 = sphi 0, %s139
      %s141 = sphi 0, %s139
      %s142 = sphi 0, %s141
      %s156 = sphi 0, %s142
      %s160 = sphi 0, %s160
      %s162 = sphi 0, %s160
      %s163 = sphi 0, %s162
      %s177 = sphi 0, %s163
      %s183 = sphi 0, %s185
      %s186 = sphi 0, %s183
      %s187 = sphi 0, %s186
      %s203 = sphi 0, %s187
    $region4: #{tpu_custom_call.1} parent=1 // loop_header_branch
      %24 = sbr.rel (%p22) target = $region8
    $region5: #{tpu_custom_call.1} parent=1 // loop_body
      %s26 = ssub.s32 %s21, 1
      %s27 = ssub.s32 %s21, 2
      %s28 = sadd.s32 %s21, 1
      %s29 = ssub.s32 %s21, %s28
      %p30 = scmp.eq.s32.totalorder %s29, 0
      %s32 = sadd.s32 %s31, 1
      %s33 = scalar_select %p30, %s31, %s32
      %p36 = pneg %p30
      %p37 = scmp.eq.s32.totalorder %s21, 1
      %p38 = por %p36, %p37
      %p39 = scmp.ne.s32.totalorder %s31, %s34
      %p40 = scmp.eq.s32.totalorder %s21, 0
      %p41 = por %p39, %p40
      %p42 = scmp.ne.s32.totalorder %s31, %s34
      %p43 = scmp.eq.s32.totalorder %s26, 1
      %p44 = por %p42, %p43
      %p45 = scmp.ne.s32.totalorder %s34, %s35
      %p46 = scmp.eq.s32.totalorder %s26, 0
      %p47 = por %p45, %p46
      %p48 = scmp.ne.s32.totalorder %s34, %s35
      %p49 = scmp.eq.s32.totalorder %s27, 1
      %p50 = por %p48, %p49
      %p52 = scmp.ne.s32.totalorder %s35, %s51
      %p53 = scmp.eq.s32.totalorder %s27, 0
      %p54 = por %p52, %p53
      %s56 = sadd.s32 %s55, 1
      %p59 = scmp.eq.s32.totalorder %s21, 1
      %p60 = scmp.ne.s32.totalorder %s55, %s57
      %p61 = scmp.eq.s32.totalorder %s21, 0
      %p62 = por %p60, %p61
      %p63 = scmp.ne.s32.totalorder %s55, %s57
      %p64 = scmp.eq.s32.totalorder %s26, 1
      %p65 = por %p63, %p64
      %p66 = scmp.ne.s32.totalorder %s57, %s58
      %p67 = scmp.eq.s32.totalorder %s26, 0
      %p68 = por %p66, %p67
      %p69 = scmp.ne.s32.totalorder %s57, %s58
      %p70 = scmp.eq.s32.totalorder %s27, 1
      %p71 = por %p69, %p70
      %p73 = scmp.ne.s32.totalorder %s58, %s72
      %p74 = scmp.eq.s32.totalorder %s27, 0
      %p75 = por %p73, %p74
      %s77 = sadd.s32 %s76, 1
      %p80 = scmp.eq.s32.totalorder %s21, 1
      %p81 = scmp.ne.s32.totalorder %s76, %s78
      %p82 = scmp.eq.s32.totalorder %s21, 0
      %p83 = por %p81, %p82
      %p84 = scmp.ne.s32.totalorder %s76, %s78
      %p85 = scmp.eq.s32.totalorder %s26, 1
      %p86 = por %p84, %p85
      %p87 = scmp.ne.s32.totalorder %s78, %s79
      %p88 = scmp.eq.s32.totalorder %s26, 0
      %p89 = por %p87, %p88
      %p90 = scmp.ne.s32.totalorder %s78, %s79
      %p91 = scmp.eq.s32.totalorder %s27, 1
      %p92 = por %p90, %p91
      %p94 = scmp.ne.s32.totalorder %s79, %s93
      %p95 = scmp.eq.s32.totalorder %s27, 0
      %p96 = por %p94, %p95
      %s98 = sadd.s32 %s97, 1
      %p101 = scmp.eq.s32.totalorder %s21, 1
      %p102 = scmp.ne.s32.totalorder %s97, %s99
      %p103 = scmp.eq.s32.totalorder %s21, 0
      %p104 = por %p102, %p103
      %p105 = scmp.ne.s32.totalorder %s97, %s99
      %p106 = scmp.eq.s32.totalorder %s26, 1
      %p107 = por %p105, %p106
      %p108 = scmp.ne.s32.totalorder %s99, %s100
      %p109 = scmp.eq.s32.totalorder %s26, 0
      %p110 = por %p108, %p109
      %p111 = scmp.ne.s32.totalorder %s99, %s100
      %p112 = scmp.eq.s32.totalorder %s27, 1
      %p113 = por %p111, %p112
      %p115 = scmp.ne.s32.totalorder %s100, %s114
      %p116 = scmp.eq.s32.totalorder %s27, 0
      %p117 = por %p115, %p116
      %s119 = sadd.s32 %s118, 1
      %p122 = scmp.eq.s32.totalorder %s21, 1
      %p123 = scmp.ne.s32.totalorder %s118, %s120
      %p124 = scmp.eq.s32.totalorder %s21, 0
      %p125 = por %p123, %p124
      %p126 = scmp.ne.s32.totalorder %s118, %s120
      %p127 = scmp.eq.s32.totalorder %s26, 1
      %p128 = por %p126, %p127
      %p129 = scmp.ne.s32.totalorder %s120, %s121
      %p130 = scmp.eq.s32.totalorder %s26, 0
      %p131 = por %p129, %p130
      %p132 = scmp.ne.s32.totalorder %s120, %s121
      %p133 = scmp.eq.s32.totalorder %s27, 1
      %p134 = por %p132, %p133
      %p136 = scmp.ne.s32.totalorder %s121, %s135
      %p137 = scmp.eq.s32.totalorder %s27, 0
      %p138 = por %p136, %p137
      %s140 = sadd.s32 %s139, 1
      %p143 = scmp.eq.s32.totalorder %s21, 1
      %p144 = scmp.ne.s32.totalorder %s139, %s141
      %p145 = scmp.eq.s32.totalorder %s21, 0
      %p146 = por %p144, %p145
      %p147 = scmp.ne.s32.totalorder %s139, %s141
      %p148 = scmp.eq.s32.totalorder %s26, 1
      %p149 = por %p147, %p148
      %p150 = scmp.ne.s32.totalorder %s141, %s142
      %p151 = scmp.eq.s32.totalorder %s26, 0
      %p152 = por %p150, %p151
      %p153 = scmp.ne.s32.totalorder %s141, %s142
      %p154 = scmp.eq.s32.totalorder %s27, 1
      %p155 = por %p153, %p154
      %p157 = scmp.ne.s32.totalorder %s142, %s156
      %p158 = scmp.eq.s32.totalorder %s27, 0
      %p159 = por %p157, %p158
      %s161 = sadd.s32 %s160, 1
      %p164 = scmp.eq.s32.totalorder %s21, 1
      %p165 = scmp.ne.s32.totalorder %s160, %s162
      %p166 = scmp.eq.s32.totalorder %s21, 0
      %p167 = por %p165, %p166
      %p168 = scmp.ne.s32.totalorder %s160, %s162
      %p169 = scmp.eq.s32.totalorder %s26, 1
      %p170 = por %p168, %p169
      %p171 = scmp.ne.s32.totalorder %s162, %s163
      %p172 = scmp.eq.s32.totalorder %s26, 0
      %p173 = por %p171, %p172
      %p174 = scmp.ne.s32.totalorder %s162, %s163
      %p175 = scmp.eq.s32.totalorder %s27, 1
      %p176 = por %p174, %p175
      %p178 = scmp.ne.s32.totalorder %s163, %s177
      %p179 = scmp.eq.s32.totalorder %s27, 0
      %p180 = por %p178, %p179
      %s181 = ssub.s32 %s21, %s28
      %p182 = scmp.eq.s32.totalorder %s181, 0
      %s184 = sadd.s32 %s183, 1
      %s185 = scalar_select %p182, %s183, %s184
      %p188 = pneg %p182
      %p189 = scmp.eq.s32.totalorder %s21, 1
      %p190 = por %p188, %p189
      %p191 = scmp.ne.s32.totalorder %s183, %s186
      %p192 = scmp.eq.s32.totalorder %s21, 0
      %p193 = por %p191, %p192
      %p194 = scmp.ne.s32.totalorder %s183, %s186
      %p195 = scmp.eq.s32.totalorder %s26, 1
      %p196 = por %p194, %p195
      %p197 = scmp.ne.s32.totalorder %s186, %s187
      %p198 = scmp.eq.s32.totalorder %s26, 0
      %p199 = por %p197, %p198
      %p200 = scmp.ne.s32.totalorder %s186, %s187
      %p201 = scmp.eq.s32.totalorder %s27, 1
      %p202 = por %p200, %p201
      %p204 = scmp.ne.s32.totalorder %s187, %s203
      %p205 = scmp.eq.s32.totalorder %s27, 0
      %p206 = por %p204, %p205
      %p207 = scmp.le.s32.totalorder 1, %s21
      %p208 = scmp.lt.s32.totalorder %s21, 3
      %p209 = pnand %p207, %p208
      %p210 = pneg %p209
      // Predicated region
      $region9: #{tpu_custom_call.1} parent=5 // pred_check
        _
      $region10: #{tpu_custom_call.1} parent=5 // pred_check_branch
        %212 = sbr.rel (%p209) target = $region12
      $region11: #{tpu_custom_call.1} parent=5 // pred_region
        %s213 = ssub.s32 %s21, 1
        // Predicated region
        $region13: #{tpu_custom_call.1} parent=11 // pred_check
          %p214 = pneg %p68
        $region14: #{tpu_custom_call.1} parent=11 // pred_check_branch
          %216 = sbr.rel (%p214) target = $region16
        $region15: #{tpu_custom_call.1} parent=11 // pred_region
          %s218 = ssub.s32 1600, 1600
          %219 = vsyncadd [#allocation6], %s218
          %s220 = sshll.u32 [#allocation5], 4
          %s221 = int_to_ptr.vmem [resolvable:$true] %s220
          %226 = dma.hbm_to_vmem [thread:$0]  %s1, 1600, %s221, [#allocation6], 64, 64, 4
        $region16: #{tpu_custom_call.1} parent=11 // pred_fallthru
          _
        // Predicated region
        $region17: #{tpu_custom_call.1} parent=11 // pred_check
          %p227 = pneg %p89
        $region18: #{tpu_custom_call.1} parent=11 // pred_check_branch
          %229 = sbr.rel (%p227) target = $region20
        $region19: #{tpu_custom_call.1} parent=11 // pred_region
          _
        $region20: #{tpu_custom_call.1} parent=11 // pred_fallthru
          _
        // Predicated region
        $region21: #{tpu_custom_call.1} parent=11 // pred_check
          %p230 = pneg %p110
        $region22: #{tpu_custom_call.1} parent=11 // pred_check_branch
          %232 = sbr.rel (%p230) target = $region24
        $region23: #{tpu_custom_call.1} parent=11 // pred_region
          %s234 = ssub.s32 1024, 1024
          %235 = vsyncadd [#allocation6], %s234
          %s236 = sshll.u32 [#allocation7], 4
          %s237 = int_to_ptr.vmem [resolvable:$true] %s236
          %242 = dma.hbm_to_vmem [thread:$0]  %s3, 1024, %s237, [#allocation6], 64, 64, 4
        $region24: #{tpu_custom_call.1} parent=11 // pred_fallthru
          _
        // Predicated region
        $region25: #{tpu_custom_call.1} parent=11 // pred_check
          %p243 = pneg %p131
        $region26: #{tpu_custom_call.1} parent=11 // pred_check_branch
          %245 = sbr.rel (%p243) target = $region28
        $region27: #{tpu_custom_call.1} parent=11 // pred_region
          _
        $region28: #{tpu_custom_call.1} parent=11 // pred_fallthru
          _
        // Predicated region
        $region29: #{tpu_custom_call.1} parent=11 // pred_check
          %p246 = pneg %p152
        $region30: #{tpu_custom_call.1} parent=11 // pred_check_branch
          %248 = sbr.rel (%p246) target = $region32
        $region31: #{tpu_custom_call.1} parent=11 // pred_region
          %s250 = ssub.s32 1024, 1024
          %251 = vsyncadd [#allocation9], %s250
          %s252 = sshll.u32 [#allocation8], 4
          %s253 = int_to_ptr.vmem [resolvable:$true] %s252
          %258 = dma.hbm_to_vmem [thread:$0]  %s5, 1024, %s253, [#allocation9], 64, 64, 4
        $region32: #{tpu_custom_call.1} parent=11 // pred_fallthru
          _
        // Predicated region
        $region33: #{tpu_custom_call.1} parent=11 // pred_check
          %p259 = pneg %p173
        $region34: #{tpu_custom_call.1} parent=11 // pred_check_branch
          %261 = sbr.rel (%p259) target = $region36
        $region35: #{tpu_custom_call.1} parent=11 // pred_region
          _
        $region36: #{tpu_custom_call.1} parent=11 // pred_fallthru
          _
      $region12: #{tpu_custom_call.1} parent=5 // pred_fallthru
        _
      %p262 = scmp.lt.s32.totalorder %s21, 2
      // Predicated region
      $region37: #{tpu_custom_call.1} parent=5 // pred_check
        %p263 = pneg %p262
      $region38: #{tpu_custom_call.1} parent=5 // pred_check_branch
        %265 = sbr.rel (%p263) target = $region40
      $region39: #{tpu_custom_call.1} parent=5 // pred_region
        // Predicated region
        $region41: #{tpu_custom_call.1} parent=39 // pred_check
          %p266 = pneg %p41
        $region42: #{tpu_custom_call.1} parent=39 // pred_check_branch
          %268 = sbr.rel (%p266) target = $region44
        $region43: #{tpu_custom_call.1} parent=39 // pred_region
          %s269 = sand.u32 %s31, 1
          %s270 = scalar_lea.sflag [#allocation3], %s269
          %s271 = sand.u32 %s31, 1
          %s272 = smul.addr %s271, 16
          %s273 = scalar_lea.vmem [#allocation2], %s272
          %s275 = ssub.s32 256, 256
          %276 = vsyncadd %s270, %s275
          %s277 = smul.addr %s21, 2
          %s278 = smul.addr %s277, 128
          %s279 = scalar_lea.hbm %s0, %s278
          %s281 = sshll.u32 %s273, 4
          %s282 = int_to_ptr.vmem [resolvable:$true] %s281
          %284 = dma.hbm_to_vmem [thread:$0]  %s279, 256, %s282, %s270
        $region44: #{tpu_custom_call.1} parent=39 // pred_fallthru
          _
      $region40: #{tpu_custom_call.1} parent=5 // pred_fallthru
        _
      %p285 = scmp.le.s32.totalorder 1, %s21
      %p286 = scmp.lt.s32.totalorder %s21, 3
      %p287 = pnand %p285, %p286
      %p288 = pneg %p287
      // Predicated region
      $region45: #{tpu_custom_call.1} parent=5 // pred_check
        _
      $region46: #{tpu_custom_call.1} parent=5 // pred_check_branch
        %290 = sbr.rel (%p287) target = $region48
      $region47: #{tpu_custom_call.1} parent=5 // pred_region
        %s291 = ssub.s32 %s21, 1
        %s292 = sand.u32 %s34, 1
        %s293 = scalar_lea.sflag [#allocation3], %s292
        %s294 = sand.u32 %s34, 1
        %s295 = smul.addr %s294, 16
        %s296 = scalar_lea.vmem [#allocation2], %s295
        // Predicated region
        $region49: #{tpu_custom_call.1} parent=47 // pred_check
          %p297 = pneg %p47
        $region50: #{tpu_custom_call.1} parent=47 // pred_check_branch
          %299 = sbr.rel (%p297) target = $region52
        $region51: #{tpu_custom_call.1} parent=47 // pred_region
          %300 = dma.done %s293, 256
        $region52: #{tpu_custom_call.1} parent=47 // pred_fallthru
          _
        // Predicated region
        $region53: #{tpu_custom_call.1} parent=47 // pred_check
          %p301 = pneg %p68
        $region54: #{tpu_custom_call.1} parent=47 // pred_check_branch
          %303 = sbr.rel (%p301) target = $region56
        $region55: #{tpu_custom_call.1} parent=47 // pred_region
          %304 = dma.done [#allocation6], 1600
        $region56: #{tpu_custom_call.1} parent=47 // pred_fallthru
          _
        // Predicated region
        $region57: #{tpu_custom_call.1} parent=47 // pred_check
          %p305 = pneg %p110
        $region58: #{tpu_custom_call.1} parent=47 // pred_check_branch
          %307 = sbr.rel (%p305) target = $region60
        $region59: #{tpu_custom_call.1} parent=47 // pred_region
          %308 = dma.done [#allocation6], 1024
        $region60: #{tpu_custom_call.1} parent=47 // pred_fallthru
          _
        // Predicated region
        $region61: #{tpu_custom_call.1} parent=47 // pred_check
          %p309 = pneg %p152
        $region62: #{tpu_custom_call.1} parent=47 // pred_check_branch
          %311 = sbr.rel (%p309) target = $region64
        $region63: #{tpu_custom_call.1} parent=47 // pred_region
          %312 = dma.done [#allocation9], 1024
        $region64: #{tpu_custom_call.1} parent=47 // pred_fallthru
          _
        %s313 = sand.u32 %s34, 1
        %s314 = scalar_lea.sflag [#allocation3], %s313
        %s315 = sand.u32 %s34, 1
        %s316 = smul.addr %s315, 16
        %s317 = scalar_lea.vmem [#allocation2], %s316
        %p318 = pneg %p47
        %p319 = pneg %p44
        %p320 = pneg %p68
        %p321 = pneg %p65
        %p322 = pneg %p89
        %p323 = pneg %p86
        %p324 = pneg %p110
        %p325 = pneg %p107
        %p326 = pneg %p131
        %p327 = pneg %p128
        %p328 = pneg %p152
        %p329 = pneg %p149
        %p330 = pneg %p173
        %p331 = pneg %p170
        %p332 = pneg %p199
        %p333 = pneg %p196
        %s334 = sand.u32 %s186, 1
        %s335 = scalar_lea.sflag [#allocation4], %s334
        %s336 = sand.u32 %s186, 1
        %s337 = smul.addr %s336, 8
        %s338 = scalar_lea.vmem [#allocation10], %s337
        %v340 = vld [vmem:[%s296] sm:$0xff]
        %v341 = vld [vmem:[%s296 + $0x8] sm:$0xff]
        %v342 = vpack.c.bf16 %v340, %v340
        %v343 = vpack.c.bf16 %v341, %v341
        %v344 = vld [vmem:[#allocation5] sm:$0xf]
        %v345 = vld [vmem:[#allocation5 + $0x4] sm:$0xf]
        %v346 = vld [vmem:[#allocation5 + $0x8] sm:$0xf]
        %v347 = vld [vmem:[#allocation5 + $0xc] sm:$0xf]
        %v348 = vld [vmem:[#allocation5 + $0x10] sm:$0xf]
        %v349 = vld [vmem:[#allocation5 + $0x14] sm:$0xf]
        %v350 = vld [vmem:[#allocation5 + $0x18] sm:$0xf]
        %v351 = vld [vmem:[#allocation5 + $0x1c] sm:$0xf]
        %v352 = vld [vmem:[#allocation5 + $0x20] sm:$0xf]
        %v353 = vld [vmem:[#allocation5 + $0x24] sm:$0xf]
        %v354 = vld [vmem:[#allocation5 + $0x28] sm:$0xf]
        %v355 = vld [vmem:[#allocation5 + $0x2c] sm:$0xf]
        %v356 = vld [vmem:[#allocation5 + $0x30] sm:$0xf]
        %v357 = vld [vmem:[#allocation5 + $0x34] sm:$0xf]
        %v358 = vld [vmem:[#allocation5 + $0x38] sm:$0xf]
        %v359 = vld [vmem:[#allocation5 + $0x3c] sm:$0xf]
        %v360 = vld [vmem:[#allocation5 + $0x40] sm:$0xf]
        %v361 = vld [vmem:[#allocation5 + $0x44] sm:$0xf]
        %v362 = vld [vmem:[#allocation5 + $0x48] sm:$0xf]
        %v363 = vld [vmem:[#allocation5 + $0x4c] sm:$0xf]
        %v364 = vld [vmem:[#allocation5 + $0x50] sm:$0xf]
        %v365 = vld [vmem:[#allocation5 + $0x54] sm:$0xf]
        %v366 = vld [vmem:[#allocation5 + $0x58] sm:$0xf]
        %v367 = vld [vmem:[#allocation5 + $0x5c] sm:$0xf]
        %v368 = vld [vmem:[#allocation5 + $0x60] sm:$0xf]
        %v369 = vld [vmem:[%s2] sm:$0x1]
        %v371 = vlaneseq
        %v372 = vshrl.u32 %v371, 7
        %v373 = vsub.s32 0, %v372
        %v374 = vrot.slane %v369, %v373
        %v401 = vunpack.c.l.b16 %v344
        %v402 = vunpack.c.l.b16 %v345
        %v403 = vunpack.c.l.b16 %v346
        %v404 = vunpack.c.l.b16 %v347
        %v405 = vunpack.c.l.b16 %v348
        %v406 = vunpack.c.l.b16 %v349
        %v407 = vunpack.c.l.b16 %v350
        %v408 = vunpack.c.l.b16 %v351
        %v409 = vunpack.c.l.b16 %v352
        %v410 = vunpack.c.l.b16 %v353
        %v411 = vunpack.c.l.b16 %v354
        %v412 = vunpack.c.l.b16 %v355
        %v413 = vunpack.c.l.b16 %v356
        %v414 = vunpack.c.l.b16 %v357
        %v415 = vunpack.c.l.b16 %v358
        %v416 = vunpack.c.l.b16 %v359
        %v417 = vunpack.c.l.b16 %v360
        %v418 = vunpack.c.l.b16 %v361
        %v419 = vunpack.c.l.b16 %v362
        %v420 = vunpack.c.l.b16 %v363
        %v421 = vunpack.c.l.b16 %v364
        %v422 = vunpack.c.l.b16 %v365
        %v423 = vunpack.c.l.b16 %v366
        %v424 = vunpack.c.l.b16 %v367
        %v425 = vunpack.c.l.b16 %v368
        %v426 = vpack.c.b16 %v402, %v401
        %v427 = vpack.c.b16 %v404, %v403
        %v428 = vpack.c.b16 %v406, %v405
        %v429 = vpack.c.b16 %v408, %v407
        %v430 = vpack.c.b16 %v410, %v409
        %v431 = vpack.c.b16 %v412, %v411
        %v432 = vpack.c.b16 %v414, %v413
        %v433 = vpack.c.b16 %v416, %v415
        %v434 = vpack.c.b16 %v418, %v417
        %v435 = vpack.c.b16 %v420, %v419
        %v436 = vpack.c.b16 %v422, %v421
        %v437 = vpack.c.b16 %v424, %v423
        %v438 = vpack.c.b16 %v425, %v425
        %vm451 = vcmask 588800
        %v453 = vsel %vm451, %v343, 0
        %vm455 = vcmask 1043456
        %v457 = vsel %vm455, %v438, 0
        %459 = vmatprep.subr.bf16.mxu0 0
        %460 = vmatpush1.bf16.msra.mxu0 %v426
        %461 = vmatprep.subr.bf16.mxu0 0
        %462 = vmatpush1.bf16.msra.mxu0 %v427
        %463 = vmatprep.subr.bf16.mxu0 0
        %464 = vmatpush1.bf16.msra.mxu0 %v428
        %465 = vmatprep.subr.bf16.mxu0 0
        %466 = vmatpush1.bf16.msra.mxu0 %v429
        %467 = vmatprep.subr.bf16.mxu0 0
        %468 = vmatpush1.bf16.msra.mxu0 %v430
        %469 = vmatprep.subr.bf16.mxu0 0
        %470 = vmatpush1.bf16.msra.mxu0 %v431
        %471 = vmatprep.subr.bf16.mxu0 0
        %472 = vmatpush1.bf16.msra.mxu0 %v432
        %473 = vmatprep.subr.bf16.mxu0 0
        %474 = vmatpush1.bf16.msra.mxu0 %v433
        %475 = vmatprep.subr.bf16.mxu0 0
        %476 = vmatpush1.bf16.msra.mxu0 %v434
        %477 = vmatprep.subr.bf16.mxu0 0
        %478 = vmatpush1.bf16.msra.mxu0 %v435
        %479 = vmatprep.subr.bf16.mxu0 0
        %480 = vmatpush1.bf16.msra.mxu0 %v436
        %481 = vmatprep.subr.bf16.mxu0 0
        %482 = vmatpush1.bf16.msra.mxu0 %v437
        %483 = vmatprep.subr.bf16.mxu0 0
        %484 = vmatpush1.bf16.msra.mxu0 %v457
        %485 = vmatprep.subr.bf16.mxu0 0
        %486 = vmatpush1.bf16.msra.mxu0 0
        %487 = vmatprep.subr.bf16.mxu0 0
        %488 = vmatpush1.bf16.msra.mxu0 0
        %489 = vmatprep.subr.bf16.mxu0 0
        %490 = vmatpush1.bf16.msra.mxu0 0
        %491 = vmatprep.mubr.bf16.mxu0 %v453
        %492 = vmatmul.mubr.bf16.gmra.mrb[0].mxu0 %v342
        %v493 = vpop.f32.mrb[0].mxu0
        %v494 = vadd.f32 %v374, %v493
        %v495 = vpop.f32.mrb[0].mxu0
        %v496 = vpop.f32.mrb[0].mxu0
        %v497 = vpop.f32.mrb[0].mxu0
        %498 = vdwg.mxu0
        %v499 = vmax.f32 %v494, 0.0
        %v500 = vpack.c.bf16 %v499, %v499
        %v501 = vld [vmem:[#allocation7] sm:$0xf]
        %v502 = vld [vmem:[#allocation7 + $0x4] sm:$0xf]
        %v503 = vld [vmem:[#allocation7 + $0x8] sm:$0xf]
        %v504 = vld [vmem:[#allocation7 + $0xc] sm:$0xf]
        %v505 = vld [vmem:[#allocation7 + $0x10] sm:$0xf]
        %v506 = vld [vmem:[#allocation7 + $0x14] sm:$0xf]
        %v507 = vld [vmem:[#allocation7 + $0x18] sm:$0xf]
        %v508 = vld [vmem:[#allocation7 + $0x1c] sm:$0xf]
        %v509 = vld [vmem:[#allocation7 + $0x20] sm:$0xf]
        %v510 = vld [vmem:[#allocation7 + $0x24] sm:$0xf]
        %v511 = vld [vmem:[#allocation7 + $0x28] sm:$0xf]
        %v512 = vld [vmem:[#allocation7 + $0x2c] sm:$0xf]
        %v513 = vld [vmem:[#allocation7 + $0x30] sm:$0xf]
        %v514 = vld [vmem:[#allocation7 + $0x34] sm:$0xf]
        %v515 = vld [vmem:[#allocation7 + $0x38] sm:$0xf]
        %v516 = vld [vmem:[#allocation7 + $0x3c] sm:$0xf]
        %v517 = vld [vmem:[%s4] sm:$0x1]
        %v519 = vlaneseq
        %v520 = vshrl.u32 %v519, 7
        %v521 = vsub.s32 0, %v520
        %v522 = vrot.slane %v517, %v521
        %v540 = vunpack.c.l.b16 %v501
        %v541 = vunpack.c.l.b16 %v502
        %v542 = vunpack.c.l.b16 %v503
        %v543 = vunpack.c.l.b16 %v504
        %v544 = vunpack.c.l.b16 %v505
        %v545 = vunpack.c.l.b16 %v506
        %v546 = vunpack.c.l.b16 %v507
        %v547 = vunpack.c.l.b16 %v508
        %v548 = vunpack.c.l.b16 %v509
        %v549 = vunpack.c.l.b16 %v510
        %v550 = vunpack.c.l.b16 %v511
        %v551 = vunpack.c.l.b16 %v512
        %v552 = vunpack.c.l.b16 %v513
        %v553 = vunpack.c.l.b16 %v514
        %v554 = vunpack.c.l.b16 %v515
        %v555 = vunpack.c.l.b16 %v516
        %v556 = vpack.c.b16 %v541, %v540
        %v557 = vpack.c.b16 %v543, %v542
        %v558 = vpack.c.b16 %v545, %v544
        %v559 = vpack.c.b16 %v547, %v546
        %v560 = vpack.c.b16 %v549, %v548
        %v561 = vpack.c.b16 %v551, %v550
        %v562 = vpack.c.b16 %v553, %v552
        %v563 = vpack.c.b16 %v555, %v554
        %572 = vmatprep.subr.bf16.mxu0 0
        %573 = vmatpush1.bf16.msra.mxu0 %v556
        %574 = vmatprep.subr.bf16.mxu0 0
        %575 = vmatpush1.bf16.msra.mxu0 %v557
        %576 = vmatprep.subr.bf16.mxu0 0
        %577 = vmatpush1.bf16.msra.mxu0 %v558
        %578 = vmatprep.subr.bf16.mxu0 0
        %579 = vmatpush1.bf16.msra.mxu0 %v559
        %580 = vmatprep.subr.bf16.mxu0 0
        %581 = vmatpush1.bf16.msra.mxu0 %v560
        %582 = vmatprep.subr.bf16.mxu0 0
        %583 = vmatpush1.bf16.msra.mxu0 %v561
        %584 = vmatprep.subr.bf16.mxu0 0
        %585 = vmatpush1.bf16.msra.mxu0 %v562
        %586 = vmatprep.subr.bf16.mxu0 0
        %587 = vmatpush1.bf16.msra.mxu0 %v563
        %588 = vmatprep.subr.bf16.mxu0 0
        %589 = vmatpush1.bf16.msra.mxu0 0
        %590 = vmatprep.subr.bf16.mxu0 0
        %591 = vmatpush1.bf16.msra.mxu0 0
        %592 = vmatprep.subr.bf16.mxu0 0
        %593 = vmatpush1.bf16.msra.mxu0 0
        %594 = vmatprep.subr.bf16.mxu0 0
        %595 = vmatpush1.bf16.msra.mxu0 0
        %596 = vmatprep.subr.bf16.mxu0 0
        %597 = vmatpush1.bf16.msra.mxu0 0
        %598 = vmatprep.subr.bf16.mxu0 0
        %599 = vmatpush1.bf16.msra.mxu0 0
        %600 = vmatprep.subr.bf16.mxu0 0
        %601 = vmatpush1.bf16.msra.mxu0 0
        %602 = vmatprep.subr.bf16.mxu0 0
        %603 = vmatpush1.bf16.msra.mxu0 0
        %604 = vmatprep.mubr.bf16.mxu0 0
        %605 = vmatmul.mubr.bf16.gmra.mrb[0].mxu0 %v500
        %v606 = vpop.f32.mrb[0].mxu0
        %v607 = vadd.f32 %v522, %v606
        %v608 = vpop.f32.mrb[0].mxu0
        %v609 = vpop.f32.mrb[0].mxu0
        %v610 = vpop.f32.mrb[0].mxu0
        %611 = vdwg.mxu0
        %v612 = vmax.f32 %v607, 0.0
        %v613 = vpack.c.bf16 %v612, %v612
        %v614 = vld [vmem:[#allocation8] sm:$0xf]
        %v615 = vld [vmem:[#allocation8 + $0x4] sm:$0xf]
        %v616 = vld [vmem:[#allocation8 + $0x8] sm:$0xf]
        %v617 = vld [vmem:[#allocation8 + $0xc] sm:$0xf]
        %v618 = vld [vmem:[#allocation8 + $0x10] sm:$0xf]
        %v619 = vld [vmem:[#allocation8 + $0x14] sm:$0xf]
        %v620 = vld [vmem:[#allocation8 + $0x18] sm:$0xf]
        %v621 = vld [vmem:[#allocation8 + $0x1c] sm:$0xf]
        %v622 = vld [vmem:[#allocation8 + $0x20] sm:$0xf]
        %v623 = vld [vmem:[#allocation8 + $0x24] sm:$0xf]
        %v624 = vld [vmem:[#allocation8 + $0x28] sm:$0xf]
        %v625 = vld [vmem:[#allocation8 + $0x2c] sm:$0xf]
        %v626 = vld [vmem:[#allocation8 + $0x30] sm:$0xf]
        %v627 = vld [vmem:[#allocation8 + $0x34] sm:$0xf]
        %v628 = vld [vmem:[#allocation8 + $0x38] sm:$0xf]
        %v629 = vld [vmem:[#allocation8 + $0x3c] sm:$0xf]
        %v630 = vld [vmem:[%s6] sm:$0x1]
        %v632 = vlaneseq
        %v633 = vshrl.u32 %v632, 7
        %v634 = vsub.s32 0, %v633
        %v635 = vrot.slane %v630, %v634
        %v653 = vunpack.c.l.b16 %v614
        %v654 = vunpack.c.l.b16 %v615
        %v655 = vunpack.c.l.b16 %v616
        %v656 = vunpack.c.l.b16 %v617
        %v657 = vunpack.c.l.b16 %v618
        %v658 = vunpack.c.l.b16 %v619
        %v659 = vunpack.c.l.b16 %v620
        %v660 = vunpack.c.l.b16 %v621
        %v661 = vunpack.c.l.b16 %v622
        %v662 = vunpack.c.l.b16 %v623
        %v663 = vunpack.c.l.b16 %v624
        %v664 = vunpack.c.l.b16 %v625
        %v665 = vunpack.c.l.b16 %v626
        %v666 = vunpack.c.l.b16 %v627
        %v667 = vunpack.c.l.b16 %v628
        %v668 = vunpack.c.l.b16 %v629
        %v669 = vpack.c.b16 %v654, %v653
        %v670 = vpack.c.b16 %v656, %v655
        %v671 = vpack.c.b16 %v658, %v657
        %v672 = vpack.c.b16 %v660, %v659
        %v673 = vpack.c.b16 %v662, %v661
        %v674 = vpack.c.b16 %v664, %v663
        %v675 = vpack.c.b16 %v666, %v665
        %v676 = vpack.c.b16 %v668, %v667
        %685 = vmatprep.subr.bf16.mxu0 0
        %686 = vmatpush1.bf16.msra.mxu0 %v669
        %687 = vmatprep.subr.bf16.mxu0 0
        %688 = vmatpush1.bf16.msra.mxu0 %v670
        %689 = vmatprep.subr.bf16.mxu0 0
        %690 = vmatpush1.bf16.msra.mxu0 %v671
        %691 = vmatprep.subr.bf16.mxu0 0
        %692 = vmatpush1.bf16.msra.mxu0 %v672
        %693 = vmatprep.subr.bf16.mxu0 0
        %694 = vmatpush1.bf16.msra.mxu0 %v673
        %695 = vmatprep.subr.bf16.mxu0 0
        %696 = vmatpush1.bf16.msra.mxu0 %v674
        %697 = vmatprep.subr.bf16.mxu0 0
        %698 = vmatpush1.bf16.msra.mxu0 %v675
        %699 = vmatprep.subr.bf16.mxu0 0
        %700 = vmatpush1.bf16.msra.mxu0 %v676
        %701 = vmatprep.subr.bf16.mxu0 0
        %702 = vmatpush1.bf16.msra.mxu0 0
        %703 = vmatprep.subr.bf16.mxu0 0
        %704 = vmatpush1.bf16.msra.mxu0 0
        %705 = vmatprep.subr.bf16.mxu0 0
        %706 = vmatpush1.bf16.msra.mxu0 0
        %707 = vmatprep.subr.bf16.mxu0 0
        %708 = vmatpush1.bf16.msra.mxu0 0
        %709 = vmatprep.subr.bf16.mxu0 0
        %710 = vmatpush1.bf16.msra.mxu0 0
        %711 = vmatprep.subr.bf16.mxu0 0
        %712 = vmatpush1.bf16.msra.mxu0 0
        %713 = vmatprep.subr.bf16.mxu0 0
        %714 = vmatpush1.bf16.msra.mxu0 0
        %715 = vmatprep.subr.bf16.mxu0 0
        %716 = vmatpush1.bf16.msra.mxu0 0
        %717 = vmatprep.mubr.bf16.mxu0 0
        %718 = vmatmul.mubr.bf16.gmra.mrb[0].mxu0 %v613
        %v719 = vpop.f32.mrb[0].mxu0
        %v720 = vadd.f32 %v635, %v719
        %v721 = vpop.f32.mrb[0].mxu0
        %v722 = vpop.f32.mrb[0].mxu0
        %v723 = vpop.f32.mrb[0].mxu0
        %724 = vdwg.mxu0
        %725 = vst [vmem:[%s338] sm:$0xff] %v720
        %s726 = sand.u32 %s186, 1
        %s727 = scalar_lea.sflag [#allocation4], %s726
        %s728 = sand.u32 %s186, 1
        %s729 = smul.addr %s728, 8
        %s730 = scalar_lea.vmem [#allocation10], %s729
        // Predicated region
        $region65: #{tpu_custom_call.1} parent=47 // pred_check
          %p731 = pneg %p196
        $region66: #{tpu_custom_call.1} parent=47 // pred_check_branch
          %733 = sbr.rel (%p731) target = $region68
        $region67: #{tpu_custom_call.1} parent=47 // pred_region
          %s735 = ssub.s32 128, 128
          %736 = vsyncadd %s727, %s735
          %s737 = smul.addr %s26, 128
          %s738 = scalar_lea.hbm %s7, %s737
          %s740 = sshll.u32 %s730, 4
          %s741 = int_to_ptr.vmem [resolvable:$true] %s740
          %743 = dma.vmem_to_hbm [thread:$0]  %s741, 128, %s738, %s727
        $region68: #{tpu_custom_call.1} parent=47 // pred_fallthru
          _
      $region48: #{tpu_custom_call.1} parent=5 // pred_fallthru
        _
      %p744 = scmp.le.s32.totalorder 2, %s21
      // Predicated region
      $region69: #{tpu_custom_call.1} parent=5 // pred_check
        %p745 = pneg %p744
      $region70: #{tpu_custom_call.1} parent=5 // pred_check_branch
        %747 = sbr.rel (%p745) target = $region72
      $region71: #{tpu_custom_call.1} parent=5 // pred_region
        %s748 = ssub.s32 %s21, 2
        // Predicated region
        $region73: #{tpu_custom_call.1} parent=71 // pred_check
          %p749 = pneg %p202
        $region74: #{tpu_custom_call.1} parent=71 // pred_check_branch
          %751 = sbr.rel (%p749) target = $region76
        $region75: #{tpu_custom_call.1} parent=71 // pred_region
          %s752 = sand.u32 %s187, 1
          %s753 = scalar_lea.sflag [#allocation4], %s752
          %s754 = sand.u32 %s187, 1
          %s755 = smul.addr %s754, 8
          %s756 = scalar_lea.vmem [#allocation10], %s755
          %757 = dma.done %s753, 128
        $region76: #{tpu_custom_call.1} parent=71 // pred_fallthru
          _
      $region72: #{tpu_custom_call.1} parent=5 // pred_fallthru
        _
    $region6: #{tpu_custom_call.1} parent=1 // loop_footer
      %s25 = sadd.s32 1, %s21
    $region7: #{tpu_custom_call.1} parent=1 // loop_footer_branch
      %20 = sbr.rel target = $region3
    $region8: #{tpu_custom_call.1} parent=1 // loop_exit
      _
    %758 = vsyncpa [#allocation3], 1
    %s759 = scalar_lea.sflag [#allocation3], 1
    %760 = vsyncpa %s759, 1
    %761 = vsyncpa [#allocation6], 1
    %762 = vsyncpa [#allocation9], 1
    %763 = vsyncpa [#allocation4], 1
    %s764 = scalar_lea.sflag [#allocation4], 1
    %765 = vsyncpa %s764, 1

</llo_original>
